<compile_context>
chip_gen: v7x
topology: tpu7x:2x2x1
jax: 0.10.0
libtpu: 0.0.40
codegen_flags: <defaults>
</compile_context>

<pallas_src>
import functools

import jax
import jax.numpy as jnp
from jax import lax
from jax.experimental import pallas as pl
from jax.experimental.pallas import tpu as pltpu


def _round_up(x, m):
    return ((x + m - 1) // m) * m


def _pick_rows(P, HW, vmem_budget_bytes=8 * 1024 * 1024):
    """Planes per grid step: divides P, multiple of 8 (or == P), VMEM-bounded."""
    per_row = HW * 4 * 6  # ~ double-buffered in/out + f32 scratch + accumulator
    cap = max(1, vmem_budget_bytes // per_row)
    if P <= cap:
        return P
    r = (min(cap, P) // 8) * 8
    while r >= 8:
        if P % r == 0:
            return r
        r -= 8
    return P  # no clean tile found; fall back to one fat block (still legal)


def _dw_kernel(x_ref, w_ref, cm_ref, o_ref, xs_ref, *, K, pad, W, front):
    """Stride-1 'same' depthwise conv on R flattened (H*W) planes.

    x_ref : (R, H*W)      input planes (one (n, c) image each)
    w_ref : (R, K*K)      per-plane filter taps
    cm_ref: (K, H*W)      0/1 column masks (kill W-boundary wraparound per kw)
    o_ref : (R, H*W)      output planes
    xs_ref: (R, Lx) f32   guard-padded flat scratch (fused zero pad + cast)
    """
    R, HW = x_ref.shape
    Lx = xs_ref.shape[1]

    # Fused zero padding: zero the guard regions, then write the plane data
    # (cast to f32 exactly once) into the 128-aligned interior.
    if pad > 0:
        xs_ref[:, :front] = jnp.zeros((R, front), jnp.float32)
        xs_ref[:, front + HW:] = jnp.zeros((R, Lx - front - HW), jnp.float32)
    xs_ref[:, front:front + HW] = x_ref[...].astype(jnp.float32)

    wv = w_ref[...].astype(jnp.float32)  # (R, K*K)
    cm = cm_ref[...]                     # (K, HW)

    # Tap (kh, kw) of the H-padded image is a uniform flat shift of kh*W + kw
    # relative to the scratch base; any read that crosses a row boundary is
    # exactly one that the column mask (or the zero guards) cancels.
    base = front - pad * (W + 1)
    acc = jnp.zeros((R, HW), jnp.float32)
    for kh in range(K):
        for kw in range(K):
            start = base + kh * W + kw
            t = kh * K + kw
            patch = xs_ref[:, start:start + HW]       # ref-level shifted load
            contrib = patch * wv[:, t:t + 1]          # (R,1) lane broadcast
            if kw != pad:
                contrib = contrib * cm[kw:kw + 1, :]  # (1,HW) sublane broadcast
            acc = acc + contrib
    o_ref[...] = acc.astype(o_ref.dtype)


def _depthwise_same_stride1(x, weight):
    """Stride-1 'same' depthwise conv, NCHW in / NCHW out, via one pallas_call."""
    N, C, H, W = x.shape
    K = weight.shape[-1]
    assert K % 2 == 1, "padding=(K-1)//2 is a 'same' conv only for odd K"
    pad = (K - 1) // 2
    HW = H * W
    P = N * C

    # Free layout plumbing only (reshapes; no transposes, no HBM padding pass).
    x_p = x.reshape(P, HW)
    w_p = jnp.tile(weight.reshape(C, K * K), (N, 1))  # (P, K*K), tiny

    col = jnp.arange(HW, dtype=jnp.int32) % W
    cmask = jnp.stack(
        [((col >= pad - kw) & (col < W + pad - kw)).astype(jnp.float32)
         for kw in range(K)],
        axis=0)  # (K, HW)

    R = _pick_rows(P, HW)
    front = 0 if pad == 0 else _round_up(pad * (W + 1), 128)  # aligned data offset
    Lx = front + HW + pad * (W + 1)

    kernel = functools.partial(_dw_kernel, K=K, pad=pad, W=W, front=front)
    out_flat = pl.pallas_call(
        kernel,
        out_shape=jax.ShapeDtypeStruct((P, HW), x.dtype),
        grid_spec=pltpu.PrefetchScalarGridSpec(
            num_scalar_prefetch=0,
            grid=(P // R,),
            in_specs=[
                pl.BlockSpec((R, HW), lambda g: (g, 0)),
                pl.BlockSpec((R, K * K), lambda g: (g, 0)),
                pl.BlockSpec((K, HW), lambda g: (0, 0)),  # stays resident across steps
            ],
            out_specs=pl.BlockSpec((R, HW), lambda g: (g, 0)),
            scratch_shapes=[pltpu.VMEM((R, Lx), jnp.float32)],
        ),
        compiler_params=pltpu.CompilerParams(
            dimension_semantics=("parallel",)),
    )(x_p, w_p, cmask)
    return out_flat.reshape(N, C, H, W)


def depthwise_conv2d(x_nchw, weight_oihw, stride=1):
    """Forward of DepthwiseConv2D: Quantization() (identity, see TODO) + depthwise conv."""
    out = _depthwise_same_stride1(x_nchw, weight_oihw)
    if stride == 1:
        return out
    # Exact for stride > 1: the strided conv output is a decimation of the
    # stride-1 'same' output (identical window start positions).
    # TODO(synk): a dedicated strided kernel would avoid the ~stride^2 overcompute.
    return out[:, :, ::stride, ::stride]


if __name__ == "__main__":
    # Module config: DepthwiseConv2D(in_channels=4, kernel_size=3, stride=1, bias=False)
    N, C, H, W = 2, 4, 16, 16
    K, stride = 3, 1

    key = jax.random.PRNGKey(0)
    kx, kw_key = jax.random.split(key)
    x = jax.random.normal(kx, (N, C, H, W), dtype=jnp.float32)
    # Conv2d(groups=C) weight shape: (C, 1, K, K); deterministic init.
    fan_in = K * K
    weight = jax.random.uniform(
        kw_key, (C, 1, K, K), dtype=jnp.float32,
        minval=-(fan_in ** -0.5), maxval=(fan_in ** -0.5))

    out = jax.block_until_ready(depthwise_conv2d(x, weight, stride))

    # Reference check against XLA's grouped conv (same semantics as nn.Conv2d).
    ref = lax.conv_general_dilated(
        x, weight,
        window_strides=(stride, stride),
        padding=[((K - 1) // 2, (K - 1) // 2)] * 2,
        dimension_numbers=("NCHW", "OIHW", "NCHW"),
        feature_group_count=C)
    assert out.shape == ref.shape == (N, C, H, W)
    assert jnp.allclose(out, ref, atol=1e-4, rtol=1e-4), float(
        jnp.max(jnp.abs(out - ref)))

    print("KERNEL_OK")
</pallas_src>

<mosaic_0001>
module attributes {stable_mosaic.version = 11 : i64} {
  func.func @_dw_kernel(%arg0: i32, %arg1: memref<8x256xf32, #tpu.memory_space<vmem>>, %arg2: memref<8x9xf32, #tpu.memory_space<vmem>>, %arg3: memref<3x256xf32, #tpu.memory_space<vmem>>, %arg4: memref<8x256xf32, #tpu.memory_space<vmem>>, %arg5: memref<8x401xf32, #tpu.memory_space<vmem>>) attributes {dimension_semantics = [#tpu.dimension_semantics<parallel>], iteration_bounds = array<i64: 1>, scalar_prefetch = 0 : i64, scratch_operands = 1 : i64, tpu.core_type = #tpu.core_type<tc>, window_params = [{transform_indices = @transform_0, window_bounds = array<i64: 8, 256>}, {transform_indices = @transform_1, window_bounds = array<i64: 8, 9>}, {pipeline_mode = #tpu.pipeline_mode<synchronous>, transform_indices = @transform_2, window_bounds = array<i64: 3, 256>}, {transform_indices = @transform_3, window_bounds = array<i64: 8, 256>}]} {
    %cst = arith.constant 0.000000e+00 : f32
    %0 = vector.broadcast %cst : f32 to vector<8x128xf32>
    %c0 = arith.constant 0 : index
    %c0_0 = arith.constant 0 : index
    %1 = vector.load %arg5[%c0, %c0_0] : memref<8x401xf32, #tpu.memory_space<vmem>>, vector<8x128xf32>
    tpu.vector_store %arg5[%c0, %c0_0], %0 {strides = array<i32>} : memref<8x401xf32, #tpu.memory_space<vmem>>, vector<8x128xf32>,
    %cst_1 = arith.constant 0.000000e+00 : f32
    %2 = vector.broadcast %cst_1 : f32 to vector<8x17xf32>
    %c0_2 = arith.constant 0 : index
    %c384 = arith.constant 384 : index
    %3 = vector.load %arg5[%c0_2, %c384] : memref<8x401xf32, #tpu.memory_space<vmem>>, vector<8x17xf32>
    tpu.vector_store %arg5[%c0_2, %c384], %2 {strides = array<i32>} : memref<8x401xf32, #tpu.memory_space<vmem>>, vector<8x17xf32>,
    %c0_3 = arith.constant 0 : index
    %c0_4 = arith.constant 0 : index
    %4 = vector.load %arg1[%c0_3, %c0_4] : memref<8x256xf32, #tpu.memory_space<vmem>>, vector<8x256xf32>
    %c0_5 = arith.constant 0 : index
    %c128 = arith.constant 128 : index
    %5 = vector.load %arg5[%c0_5, %c128] : memref<8x401xf32, #tpu.memory_space<vmem>>, vector<8x256xf32>
    tpu.vector_store %arg5[%c0_5, %c128], %4 {strides = array<i32>} : memref<8x401xf32, #tpu.memory_space<vmem>>, vector<8x256xf32>,
    %c0_6 = arith.constant 0 : index
    %c0_7 = arith.constant 0 : index
    %6 = vector.load %arg2[%c0_6, %c0_7] : memref<8x9xf32, #tpu.memory_space<vmem>>, vector<8x9xf32>
    %c0_8 = arith.constant 0 : index
    %c0_9 = arith.constant 0 : index
    %7 = vector.load %arg3[%c0_8, %c0_9] : memref<3x256xf32, #tpu.memory_space<vmem>>, vector<3x256xf32>
    %cst_10 = arith.constant 0.000000e+00 : f32
    %8 = vector.broadcast %cst_10 : f32 to vector<8x256xf32>
    %c0_11 = arith.constant 0 : index
    %c111 = arith.constant 111 : index
    %9 = vector.load %arg5[%c0_11, %c111] : memref<8x401xf32, #tpu.memory_space<vmem>>, vector<8x256xf32>
    %10 = vector.extract_strided_slice %6 {offsets = [0, 0], sizes = [8, 1], strides = [1, 1]} : vector<8x9xf32> to vector<8x1xf32>
    %11 = vector.broadcast %10 : vector<8x1xf32> to vector<8x256xf32>
    %12 = arith.mulf %9, %11 : vector<8x256xf32>
    %13 = vector.extract_strided_slice %7 {offsets = [0, 0], sizes = [1, 256], strides = [1, 1]} : vector<3x256xf32> to vector<1x256xf32>
    %14 = vector.broadcast %13 : vector<1x256xf32> to vector<8x256xf32>
    %15 = arith.mulf %12, %14 : vector<8x256xf32>
    %16 = arith.addf %8, %15 : vector<8x256xf32>
    %c0_12 = arith.constant 0 : index
    %c112 = arith.constant 112 : index
    %17 = vector.load %arg5[%c0_12, %c112] : memref<8x401xf32, #tpu.memory_space<vmem>>, vector<8x256xf32>
    %18 = vector.extract_strided_slice %6 {offsets = [0, 1], sizes = [8, 1], strides = [1, 1]} : vector<8x9xf32> to vector<8x1xf32>
    %19 = vector.broadcast %18 : vector<8x1xf32> to vector<8x256xf32>
    %20 = arith.mulf %17, %19 : vector<8x256xf32>
    %21 = arith.addf %16, %20 : vector<8x256xf32>
    %c0_13 = arith.constant 0 : index
    %c113 = arith.constant 113 : index
    %22 = vector.load %arg5[%c0_13, %c113] : memref<8x401xf32, #tpu.memory_space<vmem>>, vector<8x256xf32>
    %23 = vector.extract_strided_slice %6 {offsets = [0, 2], sizes = [8, 1], strides = [1, 1]} : vector<8x9xf32> to vector<8x1xf32>
    %24 = vector.broadcast %23 : vector<8x1xf32> to vector<8x256xf32>
    %25 = arith.mulf %22, %24 : vector<8x256xf32>
    %26 = vector.extract_strided_slice %7 {offsets = [2, 0], sizes = [1, 256], strides = [1, 1]} : vector<3x256xf32> to vector<1x256xf32>
    %27 = vector.broadcast %26 : vector<1x256xf32> to vector<8x256xf32>
    %28 = arith.mulf %25, %27 : vector<8x256xf32>
    %29 = arith.addf %21, %28 : vector<8x256xf32>
    %c0_14 = arith.constant 0 : index
    %c127 = arith.constant 127 : index
    %30 = vector.load %arg5[%c0_14, %c127] : memref<8x401xf32, #tpu.memory_space<vmem>>, vector<8x256xf32>
    %31 = vector.extract_strided_slice %6 {offsets = [0, 3], sizes = [8, 1], strides = [1, 1]} : vector<8x9xf32> to vector<8x1xf32>
    %32 = vector.broadcast %31 : vector<8x1xf32> to vector<8x256xf32>
    %33 = arith.mulf %30, %32 : vector<8x256xf32>
    %34 = vector.extract_strided_slice %7 {offsets = [0, 0], sizes = [1, 256], strides = [1, 1]} : vector<3x256xf32> to vector<1x256xf32>
    %35 = vector.broadcast %34 : vector<1x256xf32> to vector<8x256xf32>
    %36 = arith.mulf %33, %35 : vector<8x256xf32>
    %37 = arith.addf %29, %36 : vector<8x256xf32>
    %c0_15 = arith.constant 0 : index
    %c128_16 = arith.constant 128 : index
    %38 = vector.load %arg5[%c0_15, %c128_16] : memref<8x401xf32, #tpu.memory_space<vmem>>, vector<8x256xf32>
    %39 = vector.extract_strided_slice %6 {offsets = [0, 4], sizes = [8, 1], strides = [1, 1]} : vector<8x9xf32> to vector<8x1xf32>
    %40 = vector.broadcast %39 : vector<8x1xf32> to vector<8x256xf32>
    %41 = arith.mulf %38, %40 : vector<8x256xf32>
    %42 = arith.addf %37, %41 : vector<8x256xf32>
    %c0_17 = arith.constant 0 : index
    %c129 = arith.constant 129 : index
    %43 = vector.load %arg5[%c0_17, %c129] : memref<8x401xf32, #tpu.memory_space<vmem>>, vector<8x256xf32>
    %44 = vector.extract_strided_slice %6 {offsets = [0, 5], sizes = [8, 1], strides = [1, 1]} : vector<8x9xf32> to vector<8x1xf32>
    %45 = vector.broadcast %44 : vector<8x1xf32> to vector<8x256xf32>
    %46 = arith.mulf %43, %45 : vector<8x256xf32>
    %47 = vector.extract_strided_slice %7 {offsets = [2, 0], sizes = [1, 256], strides = [1, 1]} : vector<3x256xf32> to vector<1x256xf32>
    %48 = vector.broadcast %47 : vector<1x256xf32> to vector<8x256xf32>
    %49 = arith.mulf %46, %48 : vector<8x256xf32>
    %50 = arith.addf %42, %49 : vector<8x256xf32>
    %c0_18 = arith.constant 0 : index
    %c143 = arith.constant 143 : index
    %51 = vector.load %arg5[%c0_18, %c143] : memref<8x401xf32, #tpu.memory_space<vmem>>, vector<8x256xf32>
    %52 = vector.extract_strided_slice %6 {offsets = [0, 6], sizes = [8, 1], strides = [1, 1]} : vector<8x9xf32> to vector<8x1xf32>
    %53 = vector.broadcast %52 : vector<8x1xf32> to vector<8x256xf32>
    %54 = arith.mulf %51, %53 : vector<8x256xf32>
    %55 = vector.extract_strided_slice %7 {offsets = [0, 0], sizes = [1, 256], strides = [1, 1]} : vector<3x256xf32> to vector<1x256xf32>
    %56 = vector.broadcast %55 : vector<1x256xf32> to vector<8x256xf32>
    %57 = arith.mulf %54, %56 : vector<8x256xf32>
    %58 = arith.addf %50, %57 : vector<8x256xf32>
    %c0_19 = arith.constant 0 : index
    %c144 = arith.constant 144 : index
    %59 = vector.load %arg5[%c0_19, %c144] : memref<8x401xf32, #tpu.memory_space<vmem>>, vector<8x256xf32>
    %60 = vector.extract_strided_slice %6 {offsets = [0, 7], sizes = [8, 1], strides = [1, 1]} : vector<8x9xf32> to vector<8x1xf32>
    %61 = vector.broadcast %60 : vector<8x1xf32> to vector<8x256xf32>
    %62 = arith.mulf %59, %61 : vector<8x256xf32>
    %63 = arith.addf %58, %62 : vector<8x256xf32>
    %c0_20 = arith.constant 0 : index
    %c145 = arith.constant 145 : index
    %64 = vector.load %arg5[%c0_20, %c145] : memref<8x401xf32, #tpu.memory_space<vmem>>, vector<8x256xf32>
    %65 = vector.extract_strided_slice %6 {offsets = [0, 8], sizes = [8, 1], strides = [1, 1]} : vector<8x9xf32> to vector<8x1xf32>
    %66 = vector.broadcast %65 : vector<8x1xf32> to vector<8x256xf32>
    %67 = arith.mulf %64, %66 : vector<8x256xf32>
    %68 = vector.extract_strided_slice %7 {offsets = [2, 0], sizes = [1, 256], strides = [1, 1]} : vector<3x256xf32> to vector<1x256xf32>
    %69 = vector.broadcast %68 : vector<1x256xf32> to vector<8x256xf32>
    %70 = arith.mulf %67, %69 : vector<8x256xf32>
    %71 = arith.addf %63, %70 : vector<8x256xf32>
    %c0_21 = arith.constant 0 : index
    %c0_22 = arith.constant 0 : index
    %72 = vector.load %arg4[%c0_21, %c0_22] : memref<8x256xf32, #tpu.memory_space<vmem>>, vector<8x256xf32>
    tpu.vector_store %arg4[%c0_21, %c0_22], %71 {strides = array<i32>} : memref<8x256xf32, #tpu.memory_space<vmem>>, vector<8x256xf32>,
    return
  }
  func.func @transform_0(%arg0: i32) -> (i32, i32) {
    %c0_i32 = arith.constant 0 : i32
    %c0_i32_0 = arith.constant 0 : i32
    return %arg0, %c0_i32 : i32, i32
  }
  func.func @transform_1(%arg0: i32) -> (i32, i32) {
    %c0_i32 = arith.constant 0 : i32
    %c0_i32_0 = arith.constant 0 : i32
    return %arg0, %c0_i32 : i32, i32
  }
  func.func @transform_2(%arg0: i32) -> (i32, i32) {
    %c0_i32 = arith.constant 0 : i32
    %c0_i32_0 = arith.constant 0 : i32
    %c0_i32_1 = arith.constant 0 : i32
    return %c0_i32, %c0_i32_0 : i32, i32
  }
  func.func @transform_3(%arg0: i32) -> (i32, i32) {
    %c0_i32 = arith.constant 0 : i32
    %c0_i32_0 = arith.constant 0 : i32
    return %arg0, %c0_i32 : i32, i32
  }
}

</mosaic_0001>

<llo_original>
// kernel: tpu_custom_call.1
$region0: #{tpu_custom_call.1}
  #allocation0 [shape = 'u32[]', space=smem, size = 0x4, offset = 0x4, fixed_abs, tag = 'smem constant byte address 0x4 - core index']
  #allocation1 [shape = 'u32[144,128]{1,0:T(1,128)}', space=vmem, size = 0x12000, scoped, tag = 'internal scratch']
  #allocation2 [shape = 'f32[8,401]{1,0:T(8,128)}', space=vmem, size = 0x4000, scoped, tag = 'scratch operand']
  %s0 = inlined_call_operand.hbm [shape: f32[8,256], index: 0, kind: input, shape index: {}]
  %s1 = inlined_call_operand.hbm [shape: f32[8,9], index: 1, kind: input, shape index: {}]
  %s2 = inlined_call_operand.hbm [shape: f32[3,256], index: 2, kind: input, shape index: {}]
  %s3 = inlined_call_operand.hbm [shape: f32[8,256], index: 3, kind: output, shape index: {}]
  %s4 = sld [smem:[#allocation0]]
  $region34: #{tpu_custom_call.1} parent=0
    _
  %s6 = ssub.s32 1, %s4
  %s7 = scalar_select 0, %s6, %s4
  $region1: #{tpu_custom_call.1} parent=0
    #allocation3 [shape = 'u8[8192]{0}', space=vmem, size = 0x2000, scoped, tag = 'input window, operand 0, single buffered']
    #allocation4 [shape = 's32[1]{0}', space=sflag, size = 0x4, scoped, tag = 'scoped memory for tpu_custom_call.1']
    #allocation5 [shape = 's32[1]{0}', space=sflag, size = 0x4, scoped, tag = 'scoped memory for tpu_custom_call.1']
    #allocation6 [shape = 'u8[4096]{0}', space=vmem, size = 0x1000, scoped, tag = 'input window, operand 1, single buffered']
    #allocation7 [shape = 's32[1]{0}', space=sflag, size = 0x4, scoped, tag = 'scoped memory for tpu_custom_call.1']
    #allocation8 [shape = 'u8[4096]{0}', space=vmem, size = 0x1000, scoped, tag = 'input window, operand 2, single buffered']
    #allocation9 [shape = 'u8[8192]{0}', space=vmem, size = 0x2000, scoped, tag = 'output window, operand 0, single buffered']
    %8 = vsyncpa [#allocation4], 0
    %9 = vsyncpa [#allocation7], 0
    %10 = vsyncpa [#allocation5], 0
    // Predicated region
    $region2: #{tpu_custom_call.1} parent=1 // pred_check
      _
    $region3: #{tpu_custom_call.1} parent=1 // pred_check_branch
      %12 = sbr.rel (0) target = $region5
    $region4: #{tpu_custom_call.1} parent=1 // pred_region
      %s14 = ssub.s32 256, 256
      %15 = vsyncadd [#allocation4], %s14
      %s17 = sshll.u32 [#allocation3], 4
      %s18 = int_to_ptr.vmem [resolvable:$true] %s17
      %20 = dma.hbm_to_vmem [thread:$0]  %s0, 256, %s18, [#allocation4]
    $region5: #{tpu_custom_call.1} parent=1 // pred_fallthru
      _
    // Predicated region
    $region6: #{tpu_custom_call.1} parent=1 // pred_check
      _
    $region7: #{tpu_custom_call.1} parent=1 // pred_check_branch
      %22 = sbr.rel (0) target = $region9
    $region8: #{tpu_custom_call.1} parent=1 // pred_region
      %s24 = ssub.s32 128, 128
      %25 = vsyncadd [#allocation7], %s24
      %s27 = sshll.u32 [#allocation6], 4
      %s28 = int_to_ptr.vmem [resolvable:$true] %s27
      %30 = dma.hbm_to_vmem [thread:$0]  %s1, 128, %s28, [#allocation7]
    $region9: #{tpu_custom_call.1} parent=1 // pred_fallthru
      _
    // Predicated region
    $region10: #{tpu_custom_call.1} parent=1 // pred_check
      _
    $region11: #{tpu_custom_call.1} parent=1 // pred_check_branch
      %32 = sbr.rel (0) target = $region13
    $region12: #{tpu_custom_call.1} parent=1 // pred_region
      %s34 = ssub.s32 128, 128
      %35 = vsyncadd [#allocation7], %s34
      %s37 = sshll.u32 [#allocation8], 4
      %s38 = int_to_ptr.vmem [resolvable:$true] %s37
      %40 = dma.hbm_to_vmem [thread:$0]  %s2, 128, %s38, [#allocation7]
    $region13: #{tpu_custom_call.1} parent=1 // pred_fallthru
      _
    // Predicated region
    $region14: #{tpu_custom_call.1} parent=1 // pred_check
      _
    $region15: #{tpu_custom_call.1} parent=1 // pred_check_branch
      %42 = sbr.rel (0) target = $region17
    $region16: #{tpu_custom_call.1} parent=1 // pred_region
      %43 = dma.done [#allocation4], 256
    $region17: #{tpu_custom_call.1} parent=1 // pred_fallthru
      _
    // Predicated region
    $region18: #{tpu_custom_call.1} parent=1 // pred_check
      _
    $region19: #{tpu_custom_call.1} parent=1 // pred_check_branch
      %45 = sbr.rel (0) target = $region21
    $region20: #{tpu_custom_call.1} parent=1 // pred_region
      %46 = dma.done [#allocation7], 128
    $region21: #{tpu_custom_call.1} parent=1 // pred_fallthru
      _
    // Predicated region
    $region22: #{tpu_custom_call.1} parent=1 // pred_check
      _
    $region23: #{tpu_custom_call.1} parent=1 // pred_check_branch
      %48 = sbr.rel (0) target = $region25
    $region24: #{tpu_custom_call.1} parent=1 // pred_region
      %49 = dma.done [#allocation7], 128
    $region25: #{tpu_custom_call.1} parent=1 // pred_fallthru
      _
    %50 = vst [vmem:[#allocation2] sm:$0xff] 0.0
    %vm51 = vcmask 138240
    %52 = vst.msk [vmem:[#allocation2 + $0x18] sm:$0xff] %vm51, 0.0
    %v53 = vld [vmem:[#allocation3] sm:$0xff]
    %v54 = vld [vmem:[#allocation3 + $0x8] sm:$0xff]
    %55 = vst [vmem:[#allocation2 + $0x8] sm:$0xff] %v53
    %56 = vst [vmem:[#allocation2 + $0x10] sm:$0xff] %v54
    %v57 = vld [vmem:[#allocation6] sm:$0xff]
    %v58 = vld [vmem:[#allocation8] sm:$0x77]
    %v59 = vld [vmem:[#allocation2] sm:$0xff]
    %v60 = vld [vmem:[#allocation2 + $0x8] sm:$0xff]
    %v61 = vld [vmem:[#allocation2 + $0x10] sm:$0xff]
    %63 = vset.pattern.permute.xlu0 0
    %64 = vperm.xlu0 %63, %v57
    %v65 = vpop.permute.xlu0 %64
    %v67 = vmul.f32 %v59, %v65
    %v68 = vmul.f32 %v60, %v65
    %v69 = vmul.f32 %v61, %v65
    %v71 = vlaneseq
    %v72 = vshrl.u32 %v71, 7
    %v73 = vsub.s32 0, %v72
    %v74 = vrot.slane %v58, %v73
    %v75 = vlaneseq
    %v76 = vshrl.u32 %v75, 7
    %v77 = vsub.s32 4, %v76
    %v78 = vrot.slane %v58, %v77
    %v81 = vlaneseq
    %v82 = vshrl.u32 %v81, 7
    %v83 = vsub.s32 0, %v82
    %v84 = vrot.slane %v74, %v83
    %v85 = vlaneseq
    %v86 = vshrl.u32 %v85, 7
    %v87 = vsub.s32 0, %v86
    %v88 = vrot.slane %v78, %v87
    %91 = vrot.lane.b32.xlu0 %v84, 111
    %v92 = vpop.permute.xlu0 %91
    %93 = vrot.lane.b32.xlu0 %v88, 111
    %v94 = vpop.permute.xlu0 %93
    %vm95 = vcmask 908288
    %v96 = vsel %vm95, %v92, %v94
    %v100 = vmul.f32 %v67, %v92
    %v101 = vmul.f32 %v68, %v96
    %v102 = vmul.f32 %v69, %v94
    %v103 = vadd.f32 %v100, 0.0
    %v104 = vadd.f32 %v101, 0.0
    %v105 = vadd.f32 %v102, 0.0
    %106 = vset.pattern.permute.xlu0 1
    %107 = vperm.xlu0 %106, %v57
    %v108 = vpop.permute.xlu0 %107
    %v110 = vmul.f32 %v59, %v108
    %v111 = vmul.f32 %v60, %v108
    %v112 = vmul.f32 %v61, %v108
    %116 = vrot.lane.b32.xlu0 %v110, 127
    %v117 = vpop.permute.xlu0 %116
    %118 = vrot.lane.b32.xlu0 %v111, 127
    %v119 = vpop.permute.xlu0 %118
    %120 = vrot.lane.b32.xlu0 %v112, 127
    %v121 = vpop.permute.xlu0 %120
    %vm122 = vcmask 1039360
    %v123 = vsel %vm122, %v117, %v119
    %v124 = vsel %vm122, %v119, %v121
    %v128 = vadd.f32 %v103, %v123
    %v129 = vadd.f32 %v104, %v124
    %v130 = vadd.f32 %v105, %v121
    %131 = vset.pattern.permute.xlu0 2
    %132 = vperm.xlu0 %131, %v57
    %v133 = vpop.permute.xlu0 %132
    %v135 = vmul.f32 %v59, %v133
    %v136 = vmul.f32 %v60, %v133
    %v137 = vmul.f32 %v61, %v133
    %v138 = vlaneseq
    %v139 = vshrl.u32 %v138, 7
    %v140 = vsub.s32 2, %v139
    %v141 = vrot.slane %v58, %v140
    %v142 = vlaneseq
    %v143 = vshrl.u32 %v142, 7
    %v144 = vsub.s32 6, %v143
    %v145 = vrot.slane %v58, %v144
    %v148 = vlaneseq
    %v149 = vshrl.u32 %v148, 7
    %v150 = vsub.s32 2, %v149
    %v151 = vrot.slane %v141, %v150
    %v152 = vlaneseq
    %v153 = vshrl.u32 %v152, 7
    %v154 = vsub.s32 2, %v153
    %v155 = vrot.slane %v145, %v154
    %158 = vrot.lane.b32.xlu0 %v151, 113
    %v159 = vpop.permute.xlu0 %158
    %160 = vrot.lane.b32.xlu0 %v155, 113
    %v161 = vpop.permute.xlu0 %160
    %vm162 = vcmask 924672
    %v163 = vsel %vm162, %v159, %v161
    %v167 = vmul.f32 %v135, %v159
    %v168 = vmul.f32 %v136, %v163
    %v169 = vmul.f32 %v137, %v161
    %173 = vrot.lane.b32.xlu0 %v167, 126
    %v174 = vpop.permute.xlu0 %173
    %175 = vrot.lane.b32.xlu0 %v168, 126
    %v176 = vpop.permute.xlu0 %175
    %177 = vrot.lane.b32.xlu0 %v169, 126
    %v178 = vpop.permute.xlu0 %177
    %vm179 = vcmask 1031168
    %v180 = vsel %vm179, %v174, %v176
    %v181 = vsel %vm179, %v176, %v178
    %v185 = vadd.f32 %v128, %v180
    %v186 = vadd.f32 %v129, %v181
    %v187 = vadd.f32 %v130, %v178
    %188 = vset.pattern.permute.xlu0 3
    %189 = vperm.xlu0 %188, %v57
    %v190 = vpop.permute.xlu0 %189
    %v192 = vmul.f32 %v59, %v190
    %v193 = vmul.f32 %v60, %v190
    %v194 = vmul.f32 %v61, %v190
    %195 = vrot.lane.b32.xlu0 %v84, 127
    %v196 = vpop.permute.xlu0 %195
    %197 = vrot.lane.b32.xlu0 %v88, 127
    %v198 = vpop.permute.xlu0 %197
    %v199 = vsel %vm122, %v196, %v198
    %v203 = vmul.f32 %v192, %v196
    %v204 = vmul.f32 %v193, %v199
    %v205 = vmul.f32 %v194, %v198
    %209 = vrot.lane.b32.xlu0 %v203, 112
    %v210 = vpop.permute.xlu0 %209
    %211 = vrot.lane.b32.xlu0 %v204, 112
    %v212 = vpop.permute.xlu0 %211
    %213 = vrot.lane.b32.xlu0 %v205, 112
    %v214 = vpop.permute.xlu0 %213
    %vm215 = vcmask 916480
    %v216 = vsel %vm215, %v210, %v212
    %v217 = vsel %vm215, %v212, %v214
    %v221 = vadd.f32 %v185, %v216
    %v222 = vadd.f32 %v186, %v217
    %v223 = vadd.f32 %v187, %v214
    %224 = vset.pattern.permute.xlu0 4
    %225 = vperm.xlu0 %224, %v57
    %v226 = vpop.permute.xlu0 %225
    %v228 = vmul.f32 %v60, %v226
    %v229 = vmul.f32 %v61, %v226
    %232 = vrot.lane.b32.xlu0 %v228, 111
    %v233 = vpop.permute.xlu0 %232
    %234 = vrot.lane.b32.xlu0 %v229, 111
    %v235 = vpop.permute.xlu0 %234
    %v236 = vsel %vm95, %v233, %v235
    %v240 = vadd.f32 %v221, %v233
    %v241 = vadd.f32 %v222, %v236
    %v242 = vadd.f32 %v223, %v235
    %v243 = vld [vmem:[#allocation2 + $0x8] sm:$0xff]
    %v244 = vld [vmem:[#allocation2 + $0x10] sm:$0xff]
    %v245 = vld [vmem:[#allocation2 + $0x18] sm:$0xff]
    %246 = vset.pattern.permute.xlu0 5
    %247 = vperm.xlu0 %246, %v57
    %v248 = vpop.permute.xlu0 %247
    %v250 = vmul.f32 %v243, %v248
    %v251 = vmul.f32 %v244, %v248
    %v252 = vmul.f32 %v245, %v248
    %253 = vrot.lane.b32.xlu0 %v151, 1
    %v254 = vpop.permute.xlu0 %253
    %255 = vrot.lane.b32.xlu0 %v155, 1
    %v256 = vpop.permute.xlu0 %255
    %vm257 = vcmask 7168
    %v258 = vsel %vm257, %v254, %v256
    %v262 = vmul.f32 %v250, %v254
    %v263 = vmul.f32 %v251, %v258
    %v264 = vmul.f32 %v252, %v256
    %268 = vrot.lane.b32.xlu0 %v262, 110
    %v269 = vpop.permute.xlu0 %268
    %270 = vrot.lane.b32.xlu0 %v263, 110
    %v271 = vpop.permute.xlu0 %270
    %272 = vrot.lane.b32.xlu0 %v264, 110
    %v273 = vpop.permute.xlu0 %272
    %vm274 = vcmask 900096
    %v275 = vsel %vm274, %v269, %v271
    %v276 = vsel %vm274, %v271, %v273
    %v280 = vadd.f32 %v240, %v269
    %v281 = vadd.f32 %v241, %v275
    %v282 = vadd.f32 %v242, %v276
    %283 = vset.pattern.permute.xlu0 6
    %284 = vperm.xlu0 %283, %v57
    %v285 = vpop.permute.xlu0 %284
    %v287 = vmul.f32 %v243, %v285
    %v288 = vmul.f32 %v244, %v285
    %v289 = vmul.f32 %v245, %v285
    %290 = vrot.lane.b32.xlu0 %v84, 15
    %v291 = vpop.permute.xlu0 %290
    %292 = vrot.lane.b32.xlu0 %v88, 15
    %v293 = vpop.permute.xlu0 %292
    %vm294 = vcmask 121856
    %v295 = vsel %vm294, %v291, %v293
    %v299 = vmul.f32 %v287, %v291
    %v300 = vmul.f32 %v288, %v295
    %v301 = vmul.f32 %v289, %v293
    %305 = vrot.lane.b32.xlu0 %v299, 96
    %v306 = vpop.permute.xlu0 %305
    %307 = vrot.lane.b32.xlu0 %v300, 96
    %v308 = vpop.permute.xlu0 %307
    %309 = vrot.lane.b32.xlu0 %v301, 96
    %v310 = vpop.permute.xlu0 %309
    %vm311 = vcmask 785408
    %v312 = vsel %vm311, %v306, %v308
    %v313 = vsel %vm311, %v308, %v310
    %v317 = vadd.f32 %v280, %v306
    %v318 = vadd.f32 %v281, %v312
    %v319 = vadd.f32 %v282, %v313
    %320 = vset.pattern.permute.xlu0 7
    %321 = vperm.xlu0 %320, %v57
    %v322 = vpop.permute.xlu0 %321
    %v324 = vmul.f32 %v243, %v322
    %v325 = vmul.f32 %v244, %v322
    %v326 = vmul.f32 %v245, %v322
    %330 = vrot.lane.b32.xlu0 %v324, 95
    %v331 = vpop.permute.xlu0 %330
    %332 = vrot.lane.b32.xlu0 %v325, 95
    %v333 = vpop.permute.xlu0 %332
    %334 = vrot.lane.b32.xlu0 %v326, 95
    %v335 = vpop.permute.xlu0 %334
    %vm336 = vcmask 777216
    %v337 = vsel %vm336, %v331, %v333
    %v338 = vsel %vm336, %v333, %v335
    %v342 = vadd.f32 %v317, %v331
    %v343 = vadd.f32 %v318, %v337
    %v344 = vadd.f32 %v319, %v338
    %345 = vset.pattern.permute.xlu0 8
    %346 = vperm.xlu0 %345, %v57
    %v347 = vpop.permute.xlu0 %346
    %v349 = vmul.f32 %v243, %v347
    %v350 = vmul.f32 %v244, %v347
    %v351 = vmul.f32 %v245, %v347
    %352 = vrot.lane.b32.xlu0 %v151, 17
    %v353 = vpop.permute.xlu0 %352
    %354 = vrot.lane.b32.xlu0 %v155, 17
    %v355 = vpop.permute.xlu0 %354
    %v356 = vsel %vm51, %v353, %v355
    %v360 = vmul.f32 %v349, %v353
    %v361 = vmul.f32 %v350, %v356
    %v362 = vmul.f32 %v351, %v355
    %366 = vrot.lane.b32.xlu0 %v360, 94
    %v367 = vpop.permute.xlu0 %366
    %368 = vrot.lane.b32.xlu0 %v361, 94
    %v369 = vpop.permute.xlu0 %368
    %370 = vrot.lane.b32.xlu0 %v362, 94
    %v371 = vpop.permute.xlu0 %370
    %vm372 = vcmask 769024
    %v373 = vsel %vm372, %v367, %v369
    %v374 = vsel %vm372, %v369, %v371
    %v378 = vadd.f32 %v342, %v367
    %v379 = vadd.f32 %v343, %v373
    %v380 = vadd.f32 %v344, %v374
    %384 = vrot.lane.b32.xlu0 %v378, 17
    %v385 = vpop.permute.xlu0 %384
    %386 = vrot.lane.b32.xlu0 %v379, 17
    %v387 = vpop.permute.xlu0 %386
    %388 = vrot.lane.b32.xlu0 %v380, 17
    %v389 = vpop.permute.xlu0 %388
    %v390 = vsel %vm51, %v385, %v387
    %v391 = vsel %vm51, %v387, %v389
    %394 = vst [vmem:[#allocation9] sm:$0xff] %v390
    %395 = vst [vmem:[#allocation9 + $0x8] sm:$0xff] %v391
    // Predicated region
    $region26: #{tpu_custom_call.1} parent=1 // pred_check
      _
    $region27: #{tpu_custom_call.1} parent=1 // pred_check_branch
      %397 = sbr.rel (0) target = $region29
    $region28: #{tpu_custom_call.1} parent=1 // pred_region
      %s399 = ssub.s32 256, 256
      %400 = vsyncadd [#allocation5], %s399
      %s402 = sshll.u32 [#allocation9], 4
      %s403 = int_to_ptr.vmem [resolvable:$true] %s402
      %405 = dma.vmem_to_hbm [thread:$0]  %s403, 256, %s3, [#allocation5]
    $region29: #{tpu_custom_call.1} parent=1 // pred_fallthru
      _
    // Predicated region
    $region30: #{tpu_custom_call.1} parent=1 // pred_check
      _
    $region31: #{tpu_custom_call.1} parent=1 // pred_check_branch
      %407 = sbr.rel (0) target = $region33
    $region32: #{tpu_custom_call.1} parent=1 // pred_region
      %408 = dma.done [#allocation5], 256
    $region33: #{tpu_custom_call.1} parent=1 // pred_fallthru
      _
    %409 = vsyncpa [#allocation4], 1
    %410 = vsyncpa [#allocation7], 1
    %411 = vsyncpa [#allocation5], 1

</llo_original>
